<compile_context>
chip_gen: v5e
topology: v5e:2x2
jax: 0.10.0
libtpu: 0.0.40
codegen_flags: <defaults>
</compile_context>

<pallas_src>
import jax
import jax.numpy as jnp
from jax.experimental import pallas as pl
from jax.experimental.pallas import tpu as pltpu


def alignment_kernel(s_ref, h_ref, w_ref, b_ref, o_ref):
    # s_ref, h_ref : [TB, H]  (VMEM row tile)
    # w_ref        : [H, O]   (pre-transposed weight, resident across grid)
    # b_ref        : [1, O]   (resident)
    # o_ref        : [TB, O]
    x = jnp.tanh(s_ref[...] + h_ref[...])                 # VPU + EUP elementwise
    y = jnp.dot(x, w_ref[...],                            # MXU matmul, no transpose
                preferred_element_type=jnp.float32)
    o_ref[...] = (y + b_ref[...]).astype(o_ref.dtype)


def alignment_forward(s_emb, h_emb, weight, bias, *, block_rows=1024):
    """a = tanh(s_emb + h_emb) @ weight.T + bias  (the Alignment.forward hot path).

    `weight` is in PyTorch Linear layout [out_features, in_features]; it is
    transposed once here (a cheap one-time XLA op on a parameter) so the kernel
    never transposes inside VMEM.
    """
    B, H = s_emb.shape
    O = weight.shape[0]

    w_t = weight.T                      # [H, O], MXU-friendly layout
    bias2d = bias.reshape(1, O)

    # Row tile: as large as requested but no larger than the (padded) problem,
    # and sublane-aligned (multiple of 8).  Big tiles (>=512) keep the kernel at
    # the HBM roofline; small problems collapse to a single step.
    TB = min(block_rows, max(8, B))
    TB = max(8, (TB // 8) * 8)

    # Pad rows so the grid divides evenly.
    B_pad = ((B + TB - 1) // TB) * TB
    if B_pad != B:
        pad = ((0, B_pad - B), (0, 0))
        s_emb = jnp.pad(s_emb, pad)
        h_emb = jnp.pad(h_emb, pad)

    grid = (B_pad // TB,)

    out = pl.pallas_call(
        alignment_kernel,
        out_shape=jax.ShapeDtypeStruct((B_pad, O), jnp.float32),
        grid_spec=pltpu.PrefetchScalarGridSpec(
            num_scalar_prefetch=0,
            grid=grid,
            in_specs=[
                pl.BlockSpec((TB, H), lambda i: (i, 0)),   # s row tile
                pl.BlockSpec((TB, H), lambda i: (i, 0)),   # h row tile
                pl.BlockSpec((H, O), lambda i: (0, 0)),    # weight, resident
                pl.BlockSpec((1, O), lambda i: (0, 0)),    # bias, resident
            ],
            out_specs=pl.BlockSpec((TB, O), lambda i: (i, 0)),
        ),
        compiler_params=pltpu.CompilerParams(
            # Row tiles are independent -> parallel (megacore sharding on v7x).
            dimension_semantics=("parallel",),
        ),
    )(s_emb, h_emb, w_t, bias2d)

    return out[:B]


if __name__ == "__main__":
    # Module construction: input_size=96 -> hidden_size=32, output_size=16.
    # Forward only uses nn_v: Linear(hidden_size -> output_size).
    input_size = 96
    hidden_size = input_size // 3   # 32
    output_size = 16
    batch = 64                      # rows (e.g. batch*seq flattened), small test size

    key = jax.random.PRNGKey(0)
    k_s, k_h, k_w, k_b = jax.random.split(key, 4)

    s_emb = jax.random.normal(k_s, (batch, hidden_size), dtype=jnp.float32)
    h_emb = jax.random.normal(k_h, (batch, hidden_size), dtype=jnp.float32)

    # Deterministic synthetic parameters for nn_v (PyTorch Linear layout [out, in]).
    # (Module init spec is mean=0, std=0.0 for nn_v weights; small nonzero std
    #  here so the matmul path is actually exercised.)
    weight = 0.02 * jax.random.normal(k_w, (output_size, hidden_size), dtype=jnp.float32)
    bias = 0.02 * jax.random.normal(k_b, (output_size,), dtype=jnp.float32)

    # Use a small row tile here so the test exercises a multi-step pipelined grid
    # (grid = (4,)); production callers keep the default block_rows=1024.
    out = alignment_forward(s_emb, h_emb, weight, bias, block_rows=16)
    out = jax.block_until_ready(out)

    # Reference check in plain JAX.
    ref = jnp.tanh(s_emb + h_emb) @ weight.T + bias
    assert out.shape == (batch, output_size)
    assert jnp.allclose(out, ref, atol=1e-5, rtol=1e-5)

    print("KERNEL_OK")
</pallas_src>

<mosaic_0001>
module attributes {stable_mosaic.version = 11 : i64} {
  func.func @alignment_kernel(%arg0: i32, %arg1: memref<16x32xf32, #tpu.memory_space<vmem>>, %arg2: memref<16x32xf32, #tpu.memory_space<vmem>>, %arg3: memref<32x16xf32, #tpu.memory_space<vmem>>, %arg4: memref<1x16xf32, #tpu.memory_space<vmem>>, %arg5: memref<16x16xf32, #tpu.memory_space<vmem>>) attributes {dimension_semantics = [#tpu.dimension_semantics<parallel>], iteration_bounds = array<i64: 4>, scalar_prefetch = 0 : i64, scratch_operands = 0 : i64, tpu.core_type = #tpu.core_type<tc>, window_params = [{transform_indices = @transform_0, window_bounds = array<i64: 16, 32>}, {transform_indices = @transform_1, window_bounds = array<i64: 16, 32>}, {pipeline_mode = #tpu.pipeline_mode<synchronous>, transform_indices = @transform_2, window_bounds = array<i64: 32, 16>}, {pipeline_mode = #tpu.pipeline_mode<synchronous>, transform_indices = @transform_3, window_bounds = array<i64: 1, 16>}, {transform_indices = @transform_4, window_bounds = array<i64: 16, 16>}]} {
    %c0 = arith.constant 0 : index
    %c0_0 = arith.constant 0 : index
    %0 = vector.load %arg1[%c0, %c0_0] : memref<16x32xf32, #tpu.memory_space<vmem>>, vector<16x32xf32>
    %c0_1 = arith.constant 0 : index
    %c0_2 = arith.constant 0 : index
    %1 = vector.load %arg2[%c0_1, %c0_2] : memref<16x32xf32, #tpu.memory_space<vmem>>, vector<16x32xf32>
    %2 = arith.addf %0, %1 : vector<16x32xf32>
    %3 = math.tanh %2 : vector<16x32xf32>
    %c0_3 = arith.constant 0 : index
    %c0_4 = arith.constant 0 : index
    %4 = vector.load %arg3[%c0_3, %c0_4] : memref<32x16xf32, #tpu.memory_space<vmem>>, vector<32x16xf32>
    %cst = arith.constant dense<0.000000e+00> : vector<16x16xf32>
    %5 = tpu.matmul %3, %4, %cst {dimension_numbers = #tpu.dot_dimension_numbers<[1], [0], [0], [1], [0, 0, 1, 1], [], []>} : vector<16x32xf32>, vector<32x16xf32>, vector<16x16xf32> -> vector<16x16xf32>
    %c0_5 = arith.constant 0 : index
    %c0_6 = arith.constant 0 : index
    %6 = vector.load %arg4[%c0_5, %c0_6] : memref<1x16xf32, #tpu.memory_space<vmem>>, vector<1x16xf32>
    %7 = vector.broadcast %6 : vector<1x16xf32> to vector<16x16xf32>
    %8 = arith.addf %5, %7 : vector<16x16xf32>
    %c0_7 = arith.constant 0 : index
    %c0_8 = arith.constant 0 : index
    %9 = vector.load %arg5[%c0_7, %c0_8] : memref<16x16xf32, #tpu.memory_space<vmem>>, vector<16x16xf32>
    tpu.vector_store %arg5[%c0_7, %c0_8], %8 {strides = array<i32>} : memref<16x16xf32, #tpu.memory_space<vmem>>, vector<16x16xf32>,
    return
  }
  func.func @transform_0(%arg0: i32) -> (i32, i32) {
    %c0_i32 = arith.constant 0 : i32
    %c0_i32_0 = arith.constant 0 : i32
    return %arg0, %c0_i32 : i32, i32
  }
  func.func @transform_1(%arg0: i32) -> (i32, i32) {
    %c0_i32 = arith.constant 0 : i32
    %c0_i32_0 = arith.constant 0 : i32
    return %arg0, %c0_i32 : i32, i32
  }
  func.func @transform_2(%arg0: i32) -> (i32, i32) {
    %c0_i32 = arith.constant 0 : i32
    %c0_i32_0 = arith.constant 0 : i32
    %c0_i32_1 = arith.constant 0 : i32
    return %c0_i32, %c0_i32_0 : i32, i32
  }
  func.func @transform_3(%arg0: i32) -> (i32, i32) {
    %c0_i32 = arith.constant 0 : i32
    %c0_i32_0 = arith.constant 0 : i32
    %c0_i32_1 = arith.constant 0 : i32
    return %c0_i32, %c0_i32_0 : i32, i32
  }
  func.func @transform_4(%arg0: i32) -> (i32, i32) {
    %c0_i32 = arith.constant 0 : i32
    %c0_i32_0 = arith.constant 0 : i32
    return %arg0, %c0_i32 : i32, i32
  }
}

</mosaic_0001>

<llo_original>
// kernel: tpu_custom_call.1
$region0: #{tpu_custom_call.1}
  #allocation0 [shape = 'u32[]', space=smem, size = 0x4, offset = 0x4, fixed_abs, tag = 'smem constant byte address 0x4 - core index']
  #allocation1 [shape = 'u32[72,128]{1,0:T(1,128)}', space=vmem, size = 0x9000, scoped, tag = 'internal scratch']
  %s0 = inlined_call_operand.vmem [shape: f32[64,32], index: 0, kind: input, shape index: {}]
  %s1 = inlined_call_operand.vmem [shape: f32[64,32], index: 1, kind: input, shape index: {}]
  %s2 = inlined_call_operand.vmem [shape: f32[32,16], index: 2, kind: input, shape index: {}]
  %s3 = inlined_call_operand.vmem [shape: f32[1,16], index: 3, kind: input, shape index: {}]
  %s4 = inlined_call_operand.vmem [shape: f32[64,16], index: 4, kind: output, shape index: {}]
  %s5 = sld [smem:[#allocation0]]
  $region49: #{tpu_custom_call.1} parent=0
    _
  %s7 = ssub.s32 1, %s5
  %s8 = scalar_select 0, %s7, %s5
  loop: start=0, step=1, limit=6
  $region2: #{tpu_custom_call.1} parent=0 // loop_pre_header
    _
  $region3: #{tpu_custom_call.1} parent=0 // loop_header
    %s10 = sphi 0, %s14
    %p11 = scmp.ge.s32.totalorder %s10, 6
    %s20 = sphi 0, %s22
    %s23 = sphi 0, %s20
    %s24 = sphi 0, %s23
    %s40 = sphi 0, %s24
    %s46 = sphi 0, %s48
    %s49 = sphi 0, %s46
    %s50 = sphi 0, %s49
    %s66 = sphi 0, %s50
    %s70 = sphi 0, %s70
    %s72 = sphi 0, %s70
    %s73 = sphi 0, %s72
    %s87 = sphi 0, %s73
    %s91 = sphi 0, %s91
    %s93 = sphi 0, %s91
    %s94 = sphi 0, %s93
    %s108 = sphi 0, %s94
    %s114 = sphi 0, %s116
    %s117 = sphi 0, %s114
    %s118 = sphi 0, %s117
    %s134 = sphi 0, %s118
  $region4: #{tpu_custom_call.1} parent=0 // loop_header_branch
    %13 = sbr.rel (%p11) target = $region8
  $region5: #{tpu_custom_call.1} parent=0 // loop_body
    %s15 = ssub.s32 %s10, 1
    %s16 = ssub.s32 %s10, 2
    %s17 = sadd.s32 %s10, 1
    %s18 = ssub.s32 %s10, %s17
    %p19 = scmp.eq.s32.totalorder %s18, 0
    %s21 = sadd.s32 %s20, 1
    %s22 = scalar_select %p19, %s20, %s21
    %p25 = pneg %p19
    %p26 = scmp.eq.s32.totalorder %s10, 3
    %p27 = por %p25, %p26
    %p28 = scmp.ne.s32.totalorder %s20, %s23
    %p29 = scmp.eq.s32.totalorder %s10, 0
    %p30 = por %p28, %p29
    %p31 = scmp.ne.s32.totalorder %s20, %s23
    %p32 = scmp.eq.s32.totalorder %s15, 3
    %p33 = por %p31, %p32
    %p34 = scmp.ne.s32.totalorder %s23, %s24
    %p35 = scmp.eq.s32.totalorder %s15, 0
    %p36 = por %p34, %p35
    %p37 = scmp.ne.s32.totalorder %s23, %s24
    %p38 = scmp.eq.s32.totalorder %s16, 3
    %p39 = por %p37, %p38
    %p41 = scmp.ne.s32.totalorder %s24, %s40
    %p42 = scmp.eq.s32.totalorder %s16, 0
    %p43 = por %p41, %p42
    %s44 = ssub.s32 %s10, %s17
    %p45 = scmp.eq.s32.totalorder %s44, 0
    %s47 = sadd.s32 %s46, 1
    %s48 = scalar_select %p45, %s46, %s47
    %p51 = pneg %p45
    %p52 = scmp.eq.s32.totalorder %s10, 3
    %p53 = por %p51, %p52
    %p54 = scmp.ne.s32.totalorder %s46, %s49
    %p55 = scmp.eq.s32.totalorder %s10, 0
    %p56 = por %p54, %p55
    %p57 = scmp.ne.s32.totalorder %s46, %s49
    %p58 = scmp.eq.s32.totalorder %s15, 3
    %p59 = por %p57, %p58
    %p60 = scmp.ne.s32.totalorder %s49, %s50
    %p61 = scmp.eq.s32.totalorder %s15, 0
    %p62 = por %p60, %p61
    %p63 = scmp.ne.s32.totalorder %s49, %s50
    %p64 = scmp.eq.s32.totalorder %s16, 3
    %p65 = por %p63, %p64
    %p67 = scmp.ne.s32.totalorder %s50, %s66
    %p68 = scmp.eq.s32.totalorder %s16, 0
    %p69 = por %p67, %p68
    %s71 = sadd.s32 %s70, 1
    %p74 = scmp.eq.s32.totalorder %s10, 3
    %p75 = scmp.ne.s32.totalorder %s70, %s72
    %p76 = scmp.eq.s32.totalorder %s10, 0
    %p77 = por %p75, %p76
    %p78 = scmp.ne.s32.totalorder %s70, %s72
    %p79 = scmp.eq.s32.totalorder %s15, 3
    %p80 = por %p78, %p79
    %p81 = scmp.ne.s32.totalorder %s72, %s73
    %p82 = scmp.eq.s32.totalorder %s15, 0
    %p83 = por %p81, %p82
    %p84 = scmp.ne.s32.totalorder %s72, %s73
    %p85 = scmp.eq.s32.totalorder %s16, 3
    %p86 = por %p84, %p85
    %p88 = scmp.ne.s32.totalorder %s73, %s87
    %p89 = scmp.eq.s32.totalorder %s16, 0
    %p90 = por %p88, %p89
    %s92 = sadd.s32 %s91, 1
    %p95 = scmp.eq.s32.totalorder %s10, 3
    %p96 = scmp.ne.s32.totalorder %s91, %s93
    %p97 = scmp.eq.s32.totalorder %s10, 0
    %p98 = por %p96, %p97
    %p99 = scmp.ne.s32.totalorder %s91, %s93
    %p100 = scmp.eq.s32.totalorder %s15, 3
    %p101 = por %p99, %p100
    %p102 = scmp.ne.s32.totalorder %s93, %s94
    %p103 = scmp.eq.s32.totalorder %s15, 0
    %p104 = por %p102, %p103
    %p105 = scmp.ne.s32.totalorder %s93, %s94
    %p106 = scmp.eq.s32.totalorder %s16, 3
    %p107 = por %p105, %p106
    %p109 = scmp.ne.s32.totalorder %s94, %s108
    %p110 = scmp.eq.s32.totalorder %s16, 0
    %p111 = por %p109, %p110
    %s112 = ssub.s32 %s10, %s17
    %p113 = scmp.eq.s32.totalorder %s112, 0
    %s115 = sadd.s32 %s114, 1
    %s116 = scalar_select %p113, %s114, %s115
    %p119 = pneg %p113
    %p120 = scmp.eq.s32.totalorder %s10, 3
    %p121 = por %p119, %p120
    %p122 = scmp.ne.s32.totalorder %s114, %s117
    %p123 = scmp.eq.s32.totalorder %s10, 0
    %p124 = por %p122, %p123
    %p125 = scmp.ne.s32.totalorder %s114, %s117
    %p126 = scmp.eq.s32.totalorder %s15, 3
    %p127 = por %p125, %p126
    %p128 = scmp.ne.s32.totalorder %s117, %s118
    %p129 = scmp.eq.s32.totalorder %s15, 0
    %p130 = por %p128, %p129
    %p131 = scmp.ne.s32.totalorder %s117, %s118
    %p132 = scmp.eq.s32.totalorder %s16, 3
    %p133 = por %p131, %p132
    %p135 = scmp.ne.s32.totalorder %s118, %s134
    %p136 = scmp.eq.s32.totalorder %s16, 0
    %p137 = por %p135, %p136
    %p138 = scmp.le.s32.totalorder 1, %s10
    %p139 = scmp.lt.s32.totalorder %s10, 5
    %p140 = pnand %p138, %p139
    %p141 = pneg %p140
    // Predicated region
    $region9: #{tpu_custom_call.1} parent=5 // pred_check
      _
    $region10: #{tpu_custom_call.1} parent=5 // pred_check_branch
      %143 = sbr.rel (%p140) target = $region12
    $region11: #{tpu_custom_call.1} parent=5 // pred_region
      %s144 = ssub.s32 %s10, 1
      // Predicated region
      $region13: #{tpu_custom_call.1} parent=11 // pred_check
        %p145 = pneg %p83
      $region14: #{tpu_custom_call.1} parent=11 // pred_check_branch
        %147 = sbr.rel (%p145) target = $region16
      $region15: #{tpu_custom_call.1} parent=11 // pred_region
        _
      $region16: #{tpu_custom_call.1} parent=11 // pred_fallthru
        _
      // Predicated region
      $region17: #{tpu_custom_call.1} parent=11 // pred_check
        %p148 = pneg %p104
      $region18: #{tpu_custom_call.1} parent=11 // pred_check_branch
        %150 = sbr.rel (%p148) target = $region20
      $region19: #{tpu_custom_call.1} parent=11 // pred_region
        _
      $region20: #{tpu_custom_call.1} parent=11 // pred_fallthru
        _
    $region12: #{tpu_custom_call.1} parent=5 // pred_fallthru
      _
    %p151 = scmp.lt.s32.totalorder %s10, 4
    // Predicated region
    $region21: #{tpu_custom_call.1} parent=5 // pred_check
      %p152 = pneg %p151
    $region22: #{tpu_custom_call.1} parent=5 // pred_check_branch
      %154 = sbr.rel (%p152) target = $region24
    $region23: #{tpu_custom_call.1} parent=5 // pred_region
      // Predicated region
      $region25: #{tpu_custom_call.1} parent=23 // pred_check
        %p155 = pneg %p30
      $region26: #{tpu_custom_call.1} parent=23 // pred_check_branch
        %157 = sbr.rel (%p155) target = $region28
      $region27: #{tpu_custom_call.1} parent=23 // pred_region
        %s158 = smul.u32 2, %s10
        %p159 = scmp.lt.s32.totalorder %s158, 7
        %s160 = scalar_select %p159, %s158, 7
        %s161 = smul.addr %s160, 8
        %s162 = scalar_lea.vmem %s0, %s161
        %s163 = smul.u32 2, %s10
      $region28: #{tpu_custom_call.1} parent=23 // pred_fallthru
        _
      // Predicated region
      $region29: #{tpu_custom_call.1} parent=23 // pred_check
        %p164 = pneg %p56
      $region30: #{tpu_custom_call.1} parent=23 // pred_check_branch
        %166 = sbr.rel (%p164) target = $region32
      $region31: #{tpu_custom_call.1} parent=23 // pred_region
        %s167 = smul.u32 2, %s10
        %p168 = scmp.lt.s32.totalorder %s167, 7
        %s169 = scalar_select %p168, %s167, 7
        %s170 = smul.addr %s169, 8
        %s171 = scalar_lea.vmem %s1, %s170
        %s172 = smul.u32 2, %s10
      $region32: #{tpu_custom_call.1} parent=23 // pred_fallthru
        _
    $region24: #{tpu_custom_call.1} parent=5 // pred_fallthru
      _
    %p173 = scmp.le.s32.totalorder 1, %s10
    %p174 = scmp.lt.s32.totalorder %s10, 5
    %p175 = pnand %p173, %p174
    %p176 = pneg %p175
    // Predicated region
    $region33: #{tpu_custom_call.1} parent=5 // pred_check
      _
    $region34: #{tpu_custom_call.1} parent=5 // pred_check_branch
      %178 = sbr.rel (%p175) target = $region36
    $region35: #{tpu_custom_call.1} parent=5 // pred_region
      %s179 = ssub.s32 %s10, 1
      %s180 = smul.u32 2, %s15
      %p181 = scmp.lt.s32.totalorder %s180, 7
      %s182 = scalar_select %p181, %s180, 7
      %s183 = smul.addr %s182, 8
      %s184 = scalar_lea.vmem %s0, %s183
      %p185 = pneg %p36
      %p186 = pneg %p33
      %s187 = smul.u32 2, %s15
      %p188 = scmp.lt.s32.totalorder %s187, 7
      %s189 = scalar_select %p188, %s187, 7
      %s190 = smul.addr %s189, 8
      %s191 = scalar_lea.vmem %s1, %s190
      %p192 = pneg %p62
      %p193 = pneg %p59
      %p194 = pneg %p83
      %p195 = pneg %p80
      %p196 = pneg %p104
      %p197 = pneg %p101
      %p198 = pneg %p130
      %p199 = pneg %p127
      %s200 = smul.u32 2, %s15
      %p201 = scmp.lt.s32.totalorder %s200, 7
      %s202 = scalar_select %p201, %s200, 7
      %s203 = smul.addr %s202, 8
      %s204 = scalar_lea.vmem %s4, %s203
      %s205 = smul.u32 2, %s15
      %p206 = scmp.lt.s32.totalorder %s205, 7
      %s207 = scalar_select %p206, %s205, 7
      %s208 = smul.addr %s207, 8
      %s209 = scalar_lea.vmem %s0, %s208
      %s210 = smul.u32 2, %s15
      %s211 = smul.u32 2, %s15
      %p212 = scmp.lt.s32.totalorder %s211, 7
      %s213 = scalar_select %p212, %s211, 7
      %s214 = smul.addr %s213, 8
      %s215 = scalar_lea.vmem %s1, %s214
      %s216 = smul.u32 2, %s15
      %s217 = smul.u32 2, %s15
      %p218 = scmp.lt.s32.totalorder %s217, 7
      %s219 = scalar_select %p218, %s217, 7
      %s220 = smul.addr %s219, 8
      %s221 = scalar_lea.vmem %s4, %s220
      %s222 = smul.u32 2, %s15
      %v223 = vld [vmem:[%s209] sm:$0xff]
      %v224 = vld [vmem:[%s209 + $0x8] sm:$0xff]
      %v225 = vld [vmem:[%s215] sm:$0xff]
      %v226 = vld [vmem:[%s215 + $0x8] sm:$0xff]
      %v227 = vadd.f32 %v223, %v225
      %v228 = vadd.f32 %v224, %v226
      %v229 = vtanh.pop %v227
      %v230 = vtanh.pop %v228
      %v231 = vld [vmem:[%s2] sm:$0xff]
      %v232 = vld [vmem:[%s2 + $0x8] sm:$0xff]
      %v233 = vld [vmem:[%s2 + $0x10] sm:$0xff]
      %v234 = vld [vmem:[%s2 + $0x18] sm:$0xff]
      %v235 = vld [vmem:[%s3] sm:$0x1]
      %v237 = vperm.slane %v235, 0
      %vm239 = vcmask 261120
      %v241 = vsel %vm239, %v229, 0
      %v244 = vsel %vm239, %v230, 0
      %246 = vmatpush.msra.mxu0 0.0
      %247 = vmatpush.msra.mxu0 0.0
      %248 = vmatpush.msra.mxu0 0.0
      %249 = vmatpush.msra.mxu0 0.0
      %250 = vmatpush.msra.mxu0 0.0
      %251 = vmatpush.msra.mxu0 0.0
      %252 = vmatpush.msra.mxu0 0.0
      %253 = vmatpush.msra.mxu0 0.0
      %254 = vmatpush.msra.mxu0 0.0
      %255 = vmatpush.msra.mxu0 0.0
      %256 = vmatpush.msra.mxu0 0.0
      %257 = vmatpush.msra.mxu0 0.0
      %258 = vmatpush.msra.mxu0 %v234
      %259 = vmatpush.msra.mxu0 %v233
      %260 = vmatpush.msra.mxu0 %v232
      %261 = vmatpush.msra.mxu0 %v231
      %262 = vmatmul.f32.gmra.mxu0 %v241
      %v263 = vpop.f32.mrf.mxu0
      %v264 = vadd.f32 %v237, %v263
      %265 = vmatmul.f32.gmra.mxu0 %v244
      %v266 = vpop.f32.mrf.mxu0
      %v267 = vadd.f32 %v237, %v266
      %268 = vdwg.mxu0
      %vm269 = vcmask 130048
      %270 = vst.msk [vmem:[%s221] sm:$0xff] %vm269, %v264
      %271 = vst.msk [vmem:[%s221 + $0x8] sm:$0xff] %vm269, %v267
      %s272 = smul.u32 2, %s15
      %p273 = scmp.lt.s32.totalorder %s272, 7
      %s274 = scalar_select %p273, %s272, 7
      %s275 = smul.addr %s274, 8
      %s276 = scalar_lea.vmem %s4, %s275
      // Predicated region
      $region37: #{tpu_custom_call.1} parent=35 // pred_check
        %p277 = pneg %p127
      $region38: #{tpu_custom_call.1} parent=35 // pred_check_branch
        %279 = sbr.rel (%p277) target = $region40
      $region39: #{tpu_custom_call.1} parent=35 // pred_region
        %s280 = smul.u32 2, %s15
      $region40: #{tpu_custom_call.1} parent=35 // pred_fallthru
        _
    $region36: #{tpu_custom_call.1} parent=5 // pred_fallthru
      _
    %p281 = scmp.le.s32.totalorder 2, %s10
    // Predicated region
    $region41: #{tpu_custom_call.1} parent=5 // pred_check
      %p282 = pneg %p281
    $region42: #{tpu_custom_call.1} parent=5 // pred_check_branch
      %284 = sbr.rel (%p282) target = $region44
    $region43: #{tpu_custom_call.1} parent=5 // pred_region
      %s285 = ssub.s32 %s10, 2
      // Predicated region
      $region45: #{tpu_custom_call.1} parent=43 // pred_check
        %p286 = pneg %p133
      $region46: #{tpu_custom_call.1} parent=43 // pred_check_branch
        %288 = sbr.rel (%p286) target = $region48
      $region47: #{tpu_custom_call.1} parent=43 // pred_region
        %s289 = smul.u32 2, %s16
        %p290 = scmp.lt.s32.totalorder %s289, 7
        %s291 = scalar_select %p290, %s289, 7
        %s292 = smul.addr %s291, 8
        %s293 = scalar_lea.vmem %s4, %s292
      $region48: #{tpu_custom_call.1} parent=43 // pred_fallthru
        _
    $region44: #{tpu_custom_call.1} parent=5 // pred_fallthru
      _
  $region6: #{tpu_custom_call.1} parent=0 // loop_footer
    %s14 = sadd.s32 1, %s10
  $region7: #{tpu_custom_call.1} parent=0 // loop_footer_branch
    %9 = sbr.rel target = $region3
  $region8: #{tpu_custom_call.1} parent=0 // loop_exit
    _

</llo_original>
